<compile_context>
chip_gen: v5e
topology: v5e:2x2
jax: 0.10.0
libtpu: 0.0.40
codegen_flags: <defaults>
</compile_context>

<pallas_src>
import jax
import jax.numpy as jnp
from jax import lax
from jax.experimental import pallas as pl
from jax.experimental.pallas import tpu as pltpu


def _round_up(a: int, b: int) -> int:
    return (a + b - 1) // b * b


def _ffn_kernel(x_ref, w1_ref, b1_ref, w2_ref, b2_ref, g_ref, beta_ref,
                o_ref, acc_ref):
    """One (row-tile, d_ff-tile) grid step.

    grid = (row tiles, d_ff tiles);  d_ff is the reduction axis (last, "arbitrary").
    acc_ref is a (bm, d_model) f32 accumulator resident across the reduction axis.
    """
    k = pl.program_id(1)

    @pl.when(k == 0)
    def _init():
        acc_ref[...] = jnp.zeros_like(acc_ref)

    # fc1 slice + ReLU (dropout_2 is identity). Native-dtype MXU inputs, f32 accumulation.
    x = x_ref[...]
    h = jnp.dot(x, w1_ref[...], preferred_element_type=jnp.float32)
    h = jnp.maximum(h + b1_ref[...].astype(jnp.float32), 0.0)

    # Partial fc2 for this d_ff slice, accumulated in f32.
    acc_ref[...] += jnp.dot(h.astype(w2_ref.dtype), w2_ref[...],
                            preferred_element_type=jnp.float32)

    # Epilogue (only once, on the last reduction step): bias2 + residual + LayerNorm.
    @pl.when(k == pl.num_programs(1) - 1)
    def _finalize():
        y = acc_ref[...] + b2_ref[...].astype(jnp.float32)     # dropout = identity
        z = x.astype(jnp.float32) + y
        mean = jnp.mean(z, axis=-1, keepdims=True)
        zc = z - mean
        var = jnp.mean(zc * zc, axis=-1, keepdims=True)
        out = zc * lax.rsqrt(var + 1e-5)                        # eps = 1e-5 (PyTorch default)
        out = out * g_ref[...].astype(jnp.float32) + beta_ref[...].astype(jnp.float32)
        o_ref[...] = out.astype(o_ref.dtype)


def position_wise_feed_forward(x, w1, b1, w2, b2, gamma, beta, *,
                               block_rows=256, block_ff=512):
    """x: [batch, seq, d_model] -> [batch, seq, d_model].

    w1: [d_model, d_ff] (fc1.weight.T), b1: [d_ff]
    w2: [d_ff, d_model] (fc2.weight.T), b2: [d_model]
    gamma/beta: [d_model] LayerNorm affine params.
    """
    batch, seq, d_model = x.shape
    d_ff = w1.shape[1]
    n = batch * seq

    # Row tile: large & MXU-friendly, but never bigger than the 8-rounded row count.
    bm = min(block_rows, _round_up(n, 8))
    n_pad = _round_up(n, bm)

    # d_ff (reduction) tile: a lane-dense multiple of 128 for real d_ff, or whole small d_ff.
    bk = min(block_ff, d_ff)
    dff_pad = _round_up(d_ff, bk)

    x2d = x.reshape(n, d_model)
    if n_pad != n:
        x2d = jnp.pad(x2d, ((0, n_pad - n), (0, 0)))
    if dff_pad != d_ff:
        # zero-padded d_ff columns contribute relu(0)=0 and W2 rows of zeros -> no effect.
        w1 = jnp.pad(w1, ((0, 0), (0, dff_pad - d_ff)))
        b1 = jnp.pad(b1, (0, dff_pad - d_ff))
        w2 = jnp.pad(w2, ((0, dff_pad - d_ff), (0, 0)))

    b1_2d = b1.reshape(1, dff_pad)
    b2_2d = b2.reshape(1, d_model)
    g_2d = gamma.reshape(1, d_model)
    beta_2d = beta.reshape(1, d_model)

    grid = (n_pad // bm, dff_pad // bk)

    itemsize = jnp.dtype(x.dtype).itemsize
    cost = pl.CostEstimate(
        flops=4 * n_pad * d_model * dff_pad,                    # two matmuls
        transcendentals=n_pad,                                  # one rsqrt per row
        bytes_accessed=itemsize * (2 * n_pad * d_model          # x in + out
                                   + 2 * d_model * dff_pad      # W1 + W2
                                   + dff_pad + 3 * d_model),    # biases / LN params
    )

    # NOTE: for real d_model (512/768/1024) the output tile is lane-dense (multiple of 128);
    # the tiny test d_model=32 equals the full array dim, which is still a legal block shape.
    out2d = pl.pallas_call(
        _ffn_kernel,
        out_shape=jax.ShapeDtypeStruct((n_pad, d_model), x.dtype),
        grid_spec=pltpu.PrefetchScalarGridSpec(
            num_scalar_prefetch=0,
            grid=grid,
            in_specs=[
                pl.BlockSpec((bm, d_model), lambda i, k: (i, 0)),   # x rows (resident over k)
                pl.BlockSpec((d_model, bk), lambda i, k: (0, k)),   # W1 slice
                pl.BlockSpec((1, bk), lambda i, k: (0, k)),         # b1 slice
                pl.BlockSpec((bk, d_model), lambda i, k: (k, 0)),   # W2 slice
                pl.BlockSpec((1, d_model), lambda i, k: (0, 0)),    # b2 (fetched once)
                pl.BlockSpec((1, d_model), lambda i, k: (0, 0)),    # gamma (fetched once)
                pl.BlockSpec((1, d_model), lambda i, k: (0, 0)),    # beta (fetched once)
            ],
            out_specs=pl.BlockSpec((bm, d_model), lambda i, k: (i, 0)),
            scratch_shapes=[pltpu.VMEM((bm, d_model), jnp.float32)],
        ),
        compiler_params=pltpu.CompilerParams(
            dimension_semantics=("parallel", "arbitrary"),
            vmem_limit_bytes=64 * 1024 * 1024,
        ),
        cost_estimate=cost,
    )(x2d, w1, b1_2d, w2, b2_2d, g_2d, beta_2d)

    return out2d[:n].reshape(batch, seq, d_model)


def _init_params(key, d_model, d_ff, dtype=jnp.float32):
    # Deterministic init mimicking nn.Linear default (uniform(-1/sqrt(fan_in), 1/sqrt(fan_in)))
    k1, k2, k3, k4 = jax.random.split(key, 4)
    lim1 = 1.0 / (d_model ** 0.5)
    lim2 = 1.0 / (d_ff ** 0.5)
    w1 = jax.random.uniform(k1, (d_model, d_ff), dtype, -lim1, lim1)   # fc1.weight.T
    b1 = jax.random.uniform(k2, (d_ff,), dtype, -lim1, lim1)
    w2 = jax.random.uniform(k3, (d_ff, d_model), dtype, -lim2, lim2)   # fc2.weight.T
    b2 = jax.random.uniform(k4, (d_model,), dtype, -lim2, lim2)
    gamma = jnp.ones((d_model,), dtype)   # LayerNorm weight
    beta = jnp.zeros((d_model,), dtype)   # LayerNorm bias
    return w1, b1, w2, b2, gamma, beta


def _reference(x, w1, b1, w2, b2, gamma, beta):
    hp = lax.Precision.HIGHEST
    h = jnp.maximum(jnp.dot(x, w1, precision=hp) + b1, 0.0)
    y = jnp.dot(h, w2, precision=hp) + b2
    z = x + y
    mean = z.mean(-1, keepdims=True)
    var = ((z - mean) ** 2).mean(-1, keepdims=True)
    return (z - mean) / jnp.sqrt(var + 1e-5) * gamma + beta


if __name__ == "__main__":
    key = jax.random.PRNGKey(0)
    k_a, k_b = jax.random.split(key)

    # Test 1: small shapes consistent with the module (single reduction step).
    batch, seq, d_model, d_ff = 2, 8, 32, 64
    kx, kp = jax.random.split(k_a)
    x = jax.random.normal(kx, (batch, seq, d_model), jnp.float32)
    w1, b1, w2, b2, gamma, beta = _init_params(kp, d_model, d_ff)
    out = jax.block_until_ready(
        position_wise_feed_forward(x, w1, b1, w2, b2, gamma, beta))
    ref = _reference(x, w1, b1, w2, b2, gamma, beta)
    assert out.shape == (batch, seq, d_model)
    assert jnp.allclose(out, ref, atol=1e-3, rtol=1e-3), "test 1 mismatch vs reference"

    # Test 2: exercises row padding, d_ff padding and the multi-step f32 accumulator
    # path (d_ff=1000 tiled into two 512-wide reduction steps).
    batch, seq, d_model, d_ff = 1, 5, 32, 1000
    kx, kp = jax.random.split(k_b)
    x = jax.random.normal(kx, (batch, seq, d_model), jnp.float32)
    w1, b1, w2, b2, gamma, beta = _init_params(kp, d_model, d_ff)
    out = jax.block_until_ready(
        position_wise_feed_forward(x, w1, b1, w2, b2, gamma, beta, block_ff=512))
    ref = _reference(x, w1, b1, w2, b2, gamma, beta)
    assert out.shape == (batch, seq, d_model)
    assert jnp.allclose(out, ref, atol=1e-3, rtol=1e-3), "test 2 mismatch vs reference"

    print("KERNEL_OK")
</pallas_src>

<mosaic_0001>
module attributes {stable_mosaic.version = 11 : i64} {
  func.func @_ffn_kernel(%arg0: i32, %arg1: i32, %arg2: memref<16x32xf32, #tpu.memory_space<vmem>>, %arg3: memref<32x64xf32, #tpu.memory_space<vmem>>, %arg4: memref<1x64xf32, #tpu.memory_space<vmem>>, %arg5: memref<64x32xf32, #tpu.memory_space<vmem>>, %arg6: memref<1x32xf32, #tpu.memory_space<vmem>>, %arg7: memref<1x32xf32, #tpu.memory_space<vmem>>, %arg8: memref<1x32xf32, #tpu.memory_space<vmem>>, %arg9: memref<16x32xf32, #tpu.memory_space<vmem>>, %arg10: memref<16x32xf32, #tpu.memory_space<vmem>>) attributes {dimension_semantics = [#tpu.dimension_semantics<parallel>, #tpu.dimension_semantics<arbitrary>], iteration_bounds = array<i64: 1, 1>, scalar_prefetch = 0 : i64, scratch_operands = 1 : i64, tpu.core_type = #tpu.core_type<tc>, window_params = [{transform_indices = @transform_0, window_bounds = array<i64: 16, 32>}, {transform_indices = @transform_1, window_bounds = array<i64: 32, 64>}, {transform_indices = @transform_2, window_bounds = array<i64: 1, 64>}, {transform_indices = @transform_3, window_bounds = array<i64: 64, 32>}, {pipeline_mode = #tpu.pipeline_mode<synchronous>, transform_indices = @transform_4, window_bounds = array<i64: 1, 32>}, {pipeline_mode = #tpu.pipeline_mode<synchronous>, transform_indices = @transform_5, window_bounds = array<i64: 1, 32>}, {pipeline_mode = #tpu.pipeline_mode<synchronous>, transform_indices = @transform_6, window_bounds = array<i64: 1, 32>}, {transform_indices = @transform_7, window_bounds = array<i64: 16, 32>}]} {
    %c0_i32 = arith.constant 0 : i32
    %0 = arith.cmpi eq, %arg1, %c0_i32 : i32
    %1 = arith.extui %0 : i1 to i32
    %c0_i32_0 = arith.constant 0 : i32
    %2 = arith.cmpi ne, %1, %c0_i32_0 : i32
    scf.if %2 {
      %cst_16 = arith.constant 0.000000e+00 : f32
      %19 = vector.broadcast %cst_16 : f32 to vector<16x32xf32>
      %c0_17 = arith.constant 0 : index
      %c0_18 = arith.constant 0 : index
      %20 = vector.load %arg10[%c0_17, %c0_18] : memref<16x32xf32, #tpu.memory_space<vmem>>, vector<16x32xf32>
      tpu.vector_store %arg10[%c0_17, %c0_18], %19 {strides = array<i32>} : memref<16x32xf32, #tpu.memory_space<vmem>>, vector<16x32xf32>,
    } else {
    }
    %c0 = arith.constant 0 : index
    %c0_1 = arith.constant 0 : index
    %3 = vector.load %arg2[%c0, %c0_1] : memref<16x32xf32, #tpu.memory_space<vmem>>, vector<16x32xf32>
    %c0_2 = arith.constant 0 : index
    %c0_3 = arith.constant 0 : index
    %4 = vector.load %arg3[%c0_2, %c0_3] : memref<32x64xf32, #tpu.memory_space<vmem>>, vector<32x64xf32>
    %cst = arith.constant dense<0.000000e+00> : vector<16x64xf32>
    %5 = tpu.matmul %3, %4, %cst {dimension_numbers = #tpu.dot_dimension_numbers<[1], [0], [0], [1], [0, 0, 1, 1], [], []>} : vector<16x32xf32>, vector<32x64xf32>, vector<16x64xf32> -> vector<16x64xf32>
    %c0_4 = arith.constant 0 : index
    %c0_5 = arith.constant 0 : index
    %6 = vector.load %arg4[%c0_4, %c0_5] : memref<1x64xf32, #tpu.memory_space<vmem>>, vector<1x64xf32>
    %7 = vector.broadcast %6 : vector<1x64xf32> to vector<16x64xf32>
    %8 = arith.addf %5, %7 : vector<16x64xf32>
    %cst_6 = arith.constant 0.000000e+00 : f32
    %9 = vector.broadcast %cst_6 : f32 to vector<16x64xf32>
    %10 = arith.maximumf %8, %9 : vector<16x64xf32>
    %c0_7 = arith.constant 0 : index
    %c0_8 = arith.constant 0 : index
    %11 = vector.load %arg10[%c0_7, %c0_8] : memref<16x32xf32, #tpu.memory_space<vmem>>, vector<16x32xf32>
    %c0_9 = arith.constant 0 : index
    %c0_10 = arith.constant 0 : index
    %12 = vector.load %arg5[%c0_9, %c0_10] : memref<64x32xf32, #tpu.memory_space<vmem>>, vector<64x32xf32>
    %cst_11 = arith.constant dense<0.000000e+00> : vector<16x32xf32>
    %13 = tpu.matmul %10, %12, %cst_11 {dimension_numbers = #tpu.dot_dimension_numbers<[1], [0], [0], [1], [0, 0, 1, 1], [], []>} : vector<16x64xf32>, vector<64x32xf32>, vector<16x32xf32> -> vector<16x32xf32>
    %14 = arith.addf %11, %13 : vector<16x32xf32>
    %c0_12 = arith.constant 0 : index
    %c0_13 = arith.constant 0 : index
    %15 = vector.load %arg10[%c0_12, %c0_13] : memref<16x32xf32, #tpu.memory_space<vmem>>, vector<16x32xf32>
    tpu.vector_store %arg10[%c0_12, %c0_13], %14 {strides = array<i32>} : memref<16x32xf32, #tpu.memory_space<vmem>>, vector<16x32xf32>,
    %c0_i32_14 = arith.constant 0 : i32
    %16 = arith.cmpi eq, %arg1, %c0_i32_14 : i32
    %17 = arith.extui %16 : i1 to i32
    %c0_i32_15 = arith.constant 0 : i32
    %18 = arith.cmpi ne, %17, %c0_i32_15 : i32
    scf.if %18 {
      %c0_16 = arith.constant 0 : index
      %c0_17 = arith.constant 0 : index
      %19 = vector.load %arg10[%c0_16, %c0_17] : memref<16x32xf32, #tpu.memory_space<vmem>>, vector<16x32xf32>
      %c0_18 = arith.constant 0 : index
      %c0_19 = arith.constant 0 : index
      %20 = vector.load %arg6[%c0_18, %c0_19] : memref<1x32xf32, #tpu.memory_space<vmem>>, vector<1x32xf32>
      %21 = vector.broadcast %20 : vector<1x32xf32> to vector<16x32xf32>
      %22 = arith.addf %19, %21 : vector<16x32xf32>
      %23 = arith.addf %3, %22 : vector<16x32xf32>
      %cst_20 = arith.constant dense<0.000000e+00> : vector<16xf32>
      %24 = vector.multi_reduction <add>, %23, %cst_20 [1] : vector<16x32xf32> to vector<16xf32>
      %25 = vector.shape_cast %24 : vector<16xf32> to vector<16x1xf32>
      %cst_21 = arith.constant 3.200000e+01 : f32
      %26 = vector.broadcast %cst_21 : f32 to vector<16x1xf32>
      %27 = arith.divf %25, %26 : vector<16x1xf32>
      %28 = vector.broadcast %27 : vector<16x1xf32> to vector<16x32xf32>
      %29 = arith.subf %23, %28 : vector<16x32xf32>
      %30 = arith.mulf %29, %29 : vector<16x32xf32>
      %cst_22 = arith.constant dense<0.000000e+00> : vector<16xf32>
      %31 = vector.multi_reduction <add>, %30, %cst_22 [1] : vector<16x32xf32> to vector<16xf32>
      %32 = vector.shape_cast %31 : vector<16xf32> to vector<16x1xf32>
      %cst_23 = arith.constant 3.200000e+01 : f32
      %33 = vector.broadcast %cst_23 : f32 to vector<16x1xf32>
      %34 = arith.divf %32, %33 : vector<16x1xf32>
      %cst_24 = arith.constant 9.99999974E-6 : f32
      %35 = vector.broadcast %cst_24 : f32 to vector<16x1xf32>
      %36 = arith.addf %34, %35 : vector<16x1xf32>
      %37 = math.rsqrt %36 : vector<16x1xf32>
      %38 = vector.broadcast %37 : vector<16x1xf32> to vector<16x32xf32>
      %39 = arith.mulf %29, %38 : vector<16x32xf32>
      %c0_25 = arith.constant 0 : index
      %c0_26 = arith.constant 0 : index
      %40 = vector.load %arg7[%c0_25, %c0_26] : memref<1x32xf32, #tpu.memory_space<vmem>>, vector<1x32xf32>
      %41 = vector.broadcast %40 : vector<1x32xf32> to vector<16x32xf32>
      %42 = arith.mulf %39, %41 : vector<16x32xf32>
      %c0_27 = arith.constant 0 : index
      %c0_28 = arith.constant 0 : index
      %43 = vector.load %arg8[%c0_27, %c0_28] : memref<1x32xf32, #tpu.memory_space<vmem>>, vector<1x32xf32>
      %44 = vector.broadcast %43 : vector<1x32xf32> to vector<16x32xf32>
      %45 = arith.addf %42, %44 : vector<16x32xf32>
      %c0_29 = arith.constant 0 : index
      %c0_30 = arith.constant 0 : index
      %46 = vector.load %arg9[%c0_29, %c0_30] : memref<16x32xf32, #tpu.memory_space<vmem>>, vector<16x32xf32>
      tpu.vector_store %arg9[%c0_29, %c0_30], %45 {strides = array<i32>} : memref<16x32xf32, #tpu.memory_space<vmem>>, vector<16x32xf32>,
    } else {
    }
    return
  }
  func.func @transform_0(%arg0: i32, %arg1: i32) -> (i32, i32) {
    %c0_i32 = arith.constant 0 : i32
    %c0_i32_0 = arith.constant 0 : i32
    return %arg0, %c0_i32 : i32, i32
  }
  func.func @transform_1(%arg0: i32, %arg1: i32) -> (i32, i32) {
    %c0_i32 = arith.constant 0 : i32
    %c0_i32_0 = arith.constant 0 : i32
    return %c0_i32, %arg1 : i32, i32
  }
  func.func @transform_2(%arg0: i32, %arg1: i32) -> (i32, i32) {
    %c0_i32 = arith.constant 0 : i32
    %c0_i32_0 = arith.constant 0 : i32
    return %c0_i32, %arg1 : i32, i32
  }
  func.func @transform_3(%arg0: i32, %arg1: i32) -> (i32, i32) {
    %c0_i32 = arith.constant 0 : i32
    %c0_i32_0 = arith.constant 0 : i32
    return %arg1, %c0_i32 : i32, i32
  }
  func.func @transform_4(%arg0: i32, %arg1: i32) -> (i32, i32) {
    %c0_i32 = arith.constant 0 : i32
    %c0_i32_0 = arith.constant 0 : i32
    %c0_i32_1 = arith.constant 0 : i32
    return %c0_i32, %c0_i32_0 : i32, i32
  }
  func.func @transform_5(%arg0: i32, %arg1: i32) -> (i32, i32) {
    %c0_i32 = arith.constant 0 : i32
    %c0_i32_0 = arith.constant 0 : i32
    %c0_i32_1 = arith.constant 0 : i32
    return %c0_i32, %c0_i32_0 : i32, i32
  }
  func.func @transform_6(%arg0: i32, %arg1: i32) -> (i32, i32) {
    %c0_i32 = arith.constant 0 : i32
    %c0_i32_0 = arith.constant 0 : i32
    %c0_i32_1 = arith.constant 0 : i32
    return %c0_i32, %c0_i32_0 : i32, i32
  }
  func.func @transform_7(%arg0: i32, %arg1: i32) -> (i32, i32) {
    %c0_i32 = arith.constant 0 : i32
    %c0_i32_0 = arith.constant 0 : i32
    return %arg0, %c0_i32 : i32, i32
  }
}

</mosaic_0001>

<llo_original>
// kernel: tpu_custom_call.1
$region0: #{tpu_custom_call.1}
  #allocation0 [shape = 'u32[]', space=smem, size = 0x4, offset = 0x4, fixed_abs, tag = 'smem constant byte address 0x4 - core index']
  #allocation1 [shape = 'u32[72,128]{1,0:T(1,128)}', space=vmem, size = 0x9000, scoped, tag = 'internal scratch']
  #allocation2 [shape = 'f32[16,32]{1,0:T(8,128)}', space=vmem, size = 0x2000, scoped, tag = 'scratch operand']
  %s0 = inlined_call_operand.vmem [shape: f32[16,32], index: 0, kind: input, shape index: {}]
  %s1 = inlined_call_operand.vmem [shape: f32[32,64], index: 1, kind: input, shape index: {}]
  %s2 = inlined_call_operand.vmem [shape: f32[1,64], index: 2, kind: input, shape index: {}]
  %s3 = inlined_call_operand.vmem [shape: f32[64,32], index: 3, kind: input, shape index: {}]
  %s4 = inlined_call_operand.vmem [shape: f32[1,32], index: 4, kind: input, shape index: {}]
  %s5 = inlined_call_operand.vmem [shape: f32[1,32], index: 5, kind: input, shape index: {}]
  %s6 = inlined_call_operand.vmem [shape: f32[1,32], index: 6, kind: input, shape index: {}]
  %s7 = inlined_call_operand.hbm [shape: f32[16,32], index: 7, kind: output, shape index: {}]
  %s8 = sld [smem:[#allocation0]]
  $region46: #{tpu_custom_call.1} parent=0
    _
  %s10 = ssub.s32 1, %s8
  %s11 = scalar_select 0, %s10, %s8
  $region1: #{tpu_custom_call.1} parent=0
    #allocation3 [shape = 'u8[8192]{0}', space=vmem, size = 0x2000, scoped, tag = 'output window, operand 0, single buffered']
    #allocation4 [shape = 's32[1]{0}', space=sflag, size = 0x4, scoped, tag = 'scoped memory for tpu_custom_call.1']
    %12 = vsyncpa [#allocation4], 0
    // Predicated region
    $region2: #{tpu_custom_call.1} parent=1 // pred_check
      _
    $region3: #{tpu_custom_call.1} parent=1 // pred_check_branch
      %14 = sbr.rel (0) target = $region5
    $region4: #{tpu_custom_call.1} parent=1 // pred_region
      _
    $region5: #{tpu_custom_call.1} parent=1 // pred_fallthru
      _
    // Predicated region
    $region6: #{tpu_custom_call.1} parent=1 // pred_check
      _
    $region7: #{tpu_custom_call.1} parent=1 // pred_check_branch
      %16 = sbr.rel (0) target = $region9
    $region8: #{tpu_custom_call.1} parent=1 // pred_region
      _
    $region9: #{tpu_custom_call.1} parent=1 // pred_fallthru
      _
    // Predicated region
    $region10: #{tpu_custom_call.1} parent=1 // pred_check
      _
    $region11: #{tpu_custom_call.1} parent=1 // pred_check_branch
      %18 = sbr.rel (0) target = $region13
    $region12: #{tpu_custom_call.1} parent=1 // pred_region
      _
    $region13: #{tpu_custom_call.1} parent=1 // pred_fallthru
      _
    // Predicated region
    $region14: #{tpu_custom_call.1} parent=1 // pred_check
      _
    $region15: #{tpu_custom_call.1} parent=1 // pred_check_branch
      %20 = sbr.rel (0) target = $region17
    $region16: #{tpu_custom_call.1} parent=1 // pred_region
      _
    $region17: #{tpu_custom_call.1} parent=1 // pred_fallthru
      _
    // Predicated region
    $region18: #{tpu_custom_call.1} parent=1 // pred_check
      _
    $region19: #{tpu_custom_call.1} parent=1 // pred_check_branch
      %22 = sbr.rel (0) target = $region21
    $region20: #{tpu_custom_call.1} parent=1 // pred_region
      _
    $region21: #{tpu_custom_call.1} parent=1 // pred_fallthru
      _
    // Predicated region
    $region22: #{tpu_custom_call.1} parent=1 // pred_check
      _
    $region23: #{tpu_custom_call.1} parent=1 // pred_check_branch
      %24 = sbr.rel (0) target = $region25
    $region24: #{tpu_custom_call.1} parent=1 // pred_region
      _
    $region25: #{tpu_custom_call.1} parent=1 // pred_fallthru
      _
    // Predicated region
    $region26: #{tpu_custom_call.1} parent=1 // pred_check
      _
    $region27: #{tpu_custom_call.1} parent=1 // pred_check_branch
      %26 = sbr.rel (0) target = $region29
    $region28: #{tpu_custom_call.1} parent=1 // pred_region
      _
    $region29: #{tpu_custom_call.1} parent=1 // pred_fallthru
      _
    %p27 = scmp.eq.s32.totalorder 0, 0
    // Predicated region
    $region30: #{tpu_custom_call.1} parent=1 // pred_check
      %p28 = pneg %p27
    $region31: #{tpu_custom_call.1} parent=1 // pred_check_branch
      %30 = sbr.rel (%p28) target = $region33
    $region32: #{tpu_custom_call.1} parent=1 // pred_region
      %vm31 = vcmask 261120
      %32 = vst.msk [vmem:[#allocation2] sm:$0xff] %vm31, 0.0
      %33 = vst.msk [vmem:[#allocation2 + $0x8] sm:$0xff] %vm31, 0.0
    $region33: #{tpu_custom_call.1} parent=1 // pred_fallthru
      _
    %v34 = vld [vmem:[%s0] sm:$0xff]
    %v35 = vld [vmem:[%s0 + $0x8] sm:$0xff]
    %v36 = vld [vmem:[%s1] sm:$0xff]
    %v37 = vld [vmem:[%s1 + $0x8] sm:$0xff]
    %v38 = vld [vmem:[%s1 + $0x10] sm:$0xff]
    %v39 = vld [vmem:[%s1 + $0x18] sm:$0xff]
    %v40 = vld [vmem:[%s2] sm:$0x1]
    %v42 = vperm.slane %v40, 0
    %vm44 = vcmask 261120
    %v46 = vsel %vm44, %v34, 0
    %v49 = vsel %vm44, %v35, 0
    %51 = vmatpush.msra.mxu0 0.0
    %52 = vmatpush.msra.mxu0 0.0
    %53 = vmatpush.msra.mxu0 0.0
    %54 = vmatpush.msra.mxu0 0.0
    %55 = vmatpush.msra.mxu0 0.0
    %56 = vmatpush.msra.mxu0 0.0
    %57 = vmatpush.msra.mxu0 0.0
    %58 = vmatpush.msra.mxu0 0.0
    %59 = vmatpush.msra.mxu0 0.0
    %60 = vmatpush.msra.mxu0 0.0
    %61 = vmatpush.msra.mxu0 0.0
    %62 = vmatpush.msra.mxu0 0.0
    %63 = vmatpush.msra.mxu0 %v39
    %64 = vmatpush.msra.mxu0 %v38
    %65 = vmatpush.msra.mxu0 %v37
    %66 = vmatpush.msra.mxu0 %v36
    %67 = vmatmul.f32.gmra.mxu0 %v46
    %v68 = vpop.f32.mrf.mxu0
    %v69 = vadd.f32 %v42, %v68
    %70 = vmatmul.f32.gmra.mxu0 %v49
    %v71 = vpop.f32.mrf.mxu0
    %v72 = vadd.f32 %v42, %v71
    %73 = vdwg.mxu0
    %v74 = vmax.f32 %v69, 0.0
    %v75 = vmax.f32 %v72, 0.0
    %v76 = vld [vmem:[#allocation2] sm:$0xff]
    %v77 = vld [vmem:[#allocation2 + $0x8] sm:$0xff]
    %v78 = vld [vmem:[%s3] sm:$0xff]
    %v79 = vld [vmem:[%s3 + $0x8] sm:$0xff]
    %v80 = vld [vmem:[%s3 + $0x10] sm:$0xff]
    %v81 = vld [vmem:[%s3 + $0x18] sm:$0xff]
    %v82 = vld [vmem:[%s3 + $0x20] sm:$0xff]
    %v83 = vld [vmem:[%s3 + $0x28] sm:$0xff]
    %v84 = vld [vmem:[%s3 + $0x30] sm:$0xff]
    %v85 = vld [vmem:[%s3 + $0x38] sm:$0xff]
    %vm86 = vcmask 523264
    %v88 = vsel %vm86, %v74, 0
    %v91 = vsel %vm86, %v75, 0
    %93 = vmatpush.msra.mxu0 0.0
    %94 = vmatpush.msra.mxu0 0.0
    %95 = vmatpush.msra.mxu0 0.0
    %96 = vmatpush.msra.mxu0 0.0
    %97 = vmatpush.msra.mxu0 0.0
    %98 = vmatpush.msra.mxu0 0.0
    %99 = vmatpush.msra.mxu0 0.0
    %100 = vmatpush.msra.mxu0 0.0
    %101 = vmatpush.msra.mxu0 %v85
    %102 = vmatpush.msra.mxu0 %v84
    %103 = vmatpush.msra.mxu0 %v83
    %104 = vmatpush.msra.mxu0 %v82
    %105 = vmatpush.msra.mxu0 %v81
    %106 = vmatpush.msra.mxu0 %v80
    %107 = vmatpush.msra.mxu0 %v79
    %108 = vmatpush.msra.mxu0 %v78
    %109 = vmatmul.f32.gmra.mxu0 %v88
    %v110 = vpop.f32.mrf.mxu0
    %v111 = vadd.f32 0.0, %v110
    %112 = vmatmul.f32.gmra.mxu0 %v91
    %v113 = vpop.f32.mrf.mxu0
    %v114 = vadd.f32 0.0, %v113
    %115 = vdwg.mxu0
    %v116 = vadd.f32 %v76, %v111
    %v117 = vadd.f32 %v77, %v114
    %118 = vst.msk [vmem:[#allocation2] sm:$0xff] %vm44, %v116
    %119 = vst.msk [vmem:[#allocation2 + $0x8] sm:$0xff] %vm44, %v117
    // Predicated region
    $region34: #{tpu_custom_call.1} parent=1 // pred_check
      %p120 = pneg %p27
    $region35: #{tpu_custom_call.1} parent=1 // pred_check_branch
      %122 = sbr.rel (%p120) target = $region37
    $region36: #{tpu_custom_call.1} parent=1 // pred_region
      %v123 = vld [vmem:[#allocation2] sm:$0xff]
      %v124 = vld [vmem:[#allocation2 + $0x8] sm:$0xff]
      %v125 = vld [vmem:[%s4] sm:$0x1]
      %v127 = vperm.slane %v125, 0
      %v129 = vadd.f32 %v123, %v127
      %v130 = vadd.f32 %v124, %v127
      %v131 = vadd.f32 %v34, %v129
      %v132 = vadd.f32 %v35, %v130
      %v133 = vsel %vm44, %v131, 0.0
      %134 = vadd.xlane.f32.xlu0 %v133
      %v135 = vpop.xlane.xlu0 %134
      %v136 = vsel %vm44, %v132, 0.0
      %137 = vadd.xlane.f32.xlu0 %v136
      %v138 = vpop.xlane.xlu0 %137
      %v139 = vrcp.pop 32.0
      %v140 = vmul.f32 32.0, %v139
      %v141 = vsub.f32 1.0, %v140
      %v142 = vmul.f32 %v139, %v141
      %v143 = vadd.f32 %v139, %v142
      %vm144 = vweird.f32 %v139
      %v145 = vsel %vm144, %v139, %v143
      %v146 = vmul.f32 %v135, %v145
      %v147 = vmul.f32 %v138, %v145
      %v148 = vsub.f32 %v131, %v146
      %v149 = vsub.f32 %v132, %v147
      %v150 = vmul.f32 %v148, %v148
      %v151 = vmul.f32 %v149, %v149
      %v152 = vsel %vm44, %v150, 0.0
      %153 = vadd.xlane.f32.xlu0 %v152
      %v154 = vpop.xlane.xlu0 %153
      %v155 = vsel %vm44, %v151, 0.0
      %156 = vadd.xlane.f32.xlu0 %v155
      %v157 = vpop.xlane.xlu0 %156
      %v158 = vmul.f32 %v154, %v145
      %v159 = vmul.f32 %v157, %v145
      %v160 = vadd.f32 %v158, 1e-05
      %v161 = vadd.f32 %v159, 1e-05
      %v162 = vrsqrt.pop %v160
      %v163 = vmul.f32 %v162, %v160
      %v164 = vmul.f32 %v163, %v162
      %v165 = vmul.f32 0.5, %v164
      %v166 = vsub.f32 1.5, %v165
      %v167 = vmul.f32 %v162, %v166
      %vm168 = vweird.f32 %v160
      %vm169 = vweird.f32 %v162
      %vm170 = vmor %vm168, %vm169
      %v171 = vsel %vm170, %v162, %v167
      %v172 = vrsqrt.pop %v161
      %v173 = vmul.f32 %v172, %v161
      %v174 = vmul.f32 %v173, %v172
      %v175 = vmul.f32 0.5, %v174
      %v176 = vsub.f32 1.5, %v175
      %v177 = vmul.f32 %v172, %v176
      %vm178 = vweird.f32 %v161
      %vm179 = vweird.f32 %v172
      %vm180 = vmor %vm178, %vm179
      %v181 = vsel %vm180, %v172, %v177
      %v182 = vmul.f32 %v148, %v171
      %v183 = vmul.f32 %v149, %v181
      %v184 = vld [vmem:[%s5] sm:$0x1]
      %v186 = vperm.slane %v184, 0
      %v188 = vmul.f32 %v182, %v186
      %v189 = vmul.f32 %v183, %v186
      %v190 = vld [vmem:[%s6] sm:$0x1]
      %v192 = vperm.slane %v190, 0
      %v194 = vadd.f32 %v188, %v192
      %v195 = vadd.f32 %v189, %v192
      %196 = vst.msk [vmem:[#allocation3] sm:$0xff] %vm44, %v194
      %197 = vst.msk [vmem:[#allocation3 + $0x8] sm:$0xff] %vm44, %v195
    $region37: #{tpu_custom_call.1} parent=1 // pred_fallthru
      _
    // Predicated region
    $region38: #{tpu_custom_call.1} parent=1 // pred_check
      _
    $region39: #{tpu_custom_call.1} parent=1 // pred_check_branch
      %199 = sbr.rel (0) target = $region41
    $region40: #{tpu_custom_call.1} parent=1 // pred_region
      %201 = vsyncadd [#allocation4], 0
      %s202 = sshll.u32 [#allocation3], 4
      %s203 = int_to_ptr.vmem [resolvable:$true] %s202
      %s204 = sshll.u32 %s7, 4
      %s205 = int_to_ptr.hbm [resolvable:$true] %s204
      %210 = dma.vmem_to_hbm [thread:$0]  %s203, 256, %s205, [#allocation4], 128, 128, 8
    $region41: #{tpu_custom_call.1} parent=1 // pred_fallthru
      _
    // Predicated region
    $region42: #{tpu_custom_call.1} parent=1 // pred_check
      _
    $region43: #{tpu_custom_call.1} parent=1 // pred_check_branch
      %212 = sbr.rel (0) target = $region45
    $region44: #{tpu_custom_call.1} parent=1 // pred_region
      %214 = dma.done [#allocation4], 256
    $region45: #{tpu_custom_call.1} parent=1 // pred_fallthru
      _
    %215 = vsyncpa [#allocation4], 1

</llo_original>
